<compile_context>
chip_gen: v6e
topology: v6e:2x2x1
jax: 0.10.0
libtpu: 0.0.40
codegen_flags: <defaults>
</compile_context>

<pallas_src>
import functools

import jax
import jax.numpy as jnp
from jax import lax
from jax.experimental import pallas as pl
from jax.experimental.pallas import tpu as pltpu


def _spatial_attn_kernel(x_ref, w1_ref, bias_ref, w2_ref, b2_ref, o_ref):
    # x_ref:    (1, C, TS)  channels on sublanes, spatial positions on lanes
    # w1_ref:   (C, C)      conv_enc 1x1 weight with BN scale folded in (bf16)
    # bias_ref: (C, 1)      folded BN bias = beta - mean * gamma/sqrt(var+eps)
    # w2_ref:   (C, 1)      attention 1x1 conv weight
    # b2_ref:   (1, 1)      attention conv bias
    x = x_ref[0]                                              # (C, TS) f32

    # conv_enc: 1x1 conv (no bias) + inference BN (scale folded into w1).
    feat = jnp.dot(w1_ref[...], x.astype(jnp.bfloat16),
                   preferred_element_type=jnp.float32)        # MXU, f32 acc
    feat = feat + bias_ref[...]                               # (C, TS)

    # in-place ReLU: the tensor that later gets L2-normalized is relu(feat).
    r = jnp.maximum(feat, 0.0)

    # attention: 1x1 conv C->1 as VPU mul + sublane (XLU) reduction, off the
    # MXU; then Softplus with PyTorch threshold=20.
    logit = jnp.sum(r * w2_ref[...], axis=0, keepdims=True) + b2_ref[...]
    soft = jnp.log1p(jnp.exp(jnp.minimum(logit, 20.0)))
    att = jnp.where(logit > 20.0, logit, soft)                # (1, TS)

    # F.normalize(p=2, dim=channel, eps=1e-12) fused with the attention scale:
    # out = r * (att / max(||r||, 1e-12)); rsqrt goes to the EUP.
    sq = jnp.sum(r * r, axis=0, keepdims=True)                # (1, TS)
    inv = lax.rsqrt(jnp.maximum(sq, 1e-24))
    o_ref[0] = (r * (att * inv)).astype(o_ref.dtype)


@functools.partial(jax.jit, static_argnames=("ts", "bn_eps"))
def spatial_attention_2d(x_nchw, w1, bn_gamma, bn_beta, bn_mean, bn_var,
                         w2, b2, *, ts=512, bn_eps=1e-5):
    N, C, H, W = x_nchw.shape
    HW = H * W

    # Spatial tile on the lane axis: multiple of 128, no wider than needed.
    ts_eff = min(ts, pl.cdiv(HW, 128) * 128)
    HW_p = pl.cdiv(HW, ts_eff) * ts_eff

    # NCHW -> (N, C, HW): contiguous reshape, no transpose / extra HBM pass.
    x3 = x_nchw.reshape(N, C, HW)
    if HW_p != HW:
        # zero-pad ragged spatial tail; padded columns are sliced off below
        # (they produce finite garbage, never NaN, thanks to the eps clamp).
        x3 = jnp.pad(x3, ((0, 0), (0, 0), (0, HW_p - HW)))

    # Fold inference BatchNorm into the conv weight + a per-channel bias.
    scale = bn_gamma * lax.rsqrt(bn_var + bn_eps)                  # (C,)
    w1_fused = (w1 * scale[:, None]).astype(jnp.bfloat16)          # (Cout,Cin)
    bias = (bn_beta - bn_mean * scale).reshape(C, 1).astype(jnp.float32)
    w2_col = w2.reshape(C, 1).astype(jnp.float32)
    b2_arr = jnp.asarray(b2, jnp.float32).reshape(1, 1)

    grid = (N, HW_p // ts_eff)

    # VMEM: double-buffered x/out tiles + resident bf16 weight (+ headroom).
    tile_bytes = C * ts_eff * 4
    vmem_need = 4 * tile_bytes + C * C * 2 + 16 * C + (2 << 20)
    # cap at 64 MiB (v7x physical); floor well above the work for tiny shapes.
    vmem_limit = max(32 << 20, min(int(vmem_need * 3 // 2), 64 << 20))

    cost = pl.CostEstimate(
        flops=2 * N * HW_p * C * C + 6 * N * HW_p * C,
        transcendentals=2 * N * HW_p,
        bytes_accessed=2 * N * HW_p * C * 4 + C * C * 2 + 16 * C,
    )

    out = pl.pallas_call(
        _spatial_attn_kernel,
        out_shape=jax.ShapeDtypeStruct((N, C, HW_p), x_nchw.dtype),
        grid_spec=pltpu.PrefetchScalarGridSpec(
            num_scalar_prefetch=0,
            grid=grid,
            in_specs=[
                pl.BlockSpec((1, C, ts_eff), lambda n, j: (n, 0, j)),  # x
                pl.BlockSpec((C, C), lambda n, j: (0, 0)),             # w1*scale
                pl.BlockSpec((C, 1), lambda n, j: (0, 0)),             # bn bias
                pl.BlockSpec((C, 1), lambda n, j: (0, 0)),             # w2
                pl.BlockSpec((1, 1), lambda n, j: (0, 0)),             # b2
            ],
            out_specs=pl.BlockSpec((1, C, ts_eff), lambda n, j: (n, 0, j)),
        ),
        compiler_params=pltpu.CompilerParams(
            dimension_semantics=("parallel", "parallel"),
            vmem_limit_bytes=vmem_limit),
        cost_estimate=cost,
    )(x3, w1_fused, bias, w2_col, b2_arr)

    if HW_p != HW:
        out = out[:, :, :HW]
    return out.reshape(N, C, H, W)


def _reference(x_nchw, w1, bn_gamma, bn_beta, bn_mean, bn_var, w2, b2,
               bn_eps=1e-5):
    # Pure-JAX f32 reference of the same (in-place ReLU) semantics, NCHW.
    feat = jnp.einsum("nchw,oc->nohw", x_nchw, w1)
    scale = bn_gamma / jnp.sqrt(bn_var + bn_eps)
    feat = feat * scale[None, :, None, None] + (
        bn_beta - bn_mean * scale)[None, :, None, None]
    r = jnp.maximum(feat, 0.0)
    logit = jnp.einsum("nchw,c->nhw", r, w2)[:, None, :, :] + b2
    att = jnp.where(logit > 20.0, logit,
                    jnp.log1p(jnp.exp(jnp.minimum(logit, 20.0))))
    denom = jnp.maximum(jnp.sqrt(jnp.sum(r * r, axis=1, keepdims=True)), 1e-12)
    return (r / denom) * att


if __name__ == "__main__":
    N, C, H, W = 2, 128, 16, 16   # small shapes; module default is C=1024
    key = jax.random.PRNGKey(0)
    k = jax.random.split(key, 8)

    x = jax.random.normal(k[0], (N, C, H, W), dtype=jnp.float32)

    # conv_enc[0]: Conv2d(C, C, 1, bias=False) -> weight (C_out, C_in)
    w1 = jax.random.normal(k[1], (C, C), dtype=jnp.float32) / jnp.sqrt(C)
    # conv_enc[1]: BatchNorm2d(C) -- inference-mode running stats
    bn_gamma = 1.0 + 0.1 * jax.random.normal(k[2], (C,), dtype=jnp.float32)
    bn_beta = 0.1 * jax.random.normal(k[3], (C,), dtype=jnp.float32)
    bn_mean = 0.05 * jax.random.normal(k[4], (C,), dtype=jnp.float32)
    bn_var = jnp.abs(1.0 + 0.1 * jax.random.normal(k[5], (C,), jnp.float32))
    # attention[1]: Conv2d(C, 1, 1, bias=True)
    w2 = jax.random.normal(k[6], (C,), dtype=jnp.float32) / jnp.sqrt(C)
    b2 = 0.1 * jax.random.normal(k[7], (), dtype=jnp.float32)

    out = spatial_attention_2d(x, w1, bn_gamma, bn_beta, bn_mean, bn_var,
                               w2, b2)
    out = jax.block_until_ready(out)

    ref = _reference(x, w1, bn_gamma, bn_beta, bn_mean, bn_var, w2, b2)
    assert out.shape == (N, C, H, W)
    # bf16 MXU operands vs. an f32 reference -> relaxed tolerance.
    assert jnp.allclose(out, ref, atol=2e-2, rtol=2e-2), "mismatch vs reference"
    print("KERNEL_OK")
</pallas_src>

<mosaic_0001>
module attributes {stable_mosaic.version = 11 : i64} {
  func.func @_spatial_attn_kernel(%arg0: i32, %arg1: i32, %arg2: memref<1x128x256xf32, #tpu.memory_space<vmem>>, %arg3: memref<128x128xbf16, #tpu.memory_space<vmem>>, %arg4: memref<128x1xf32, #tpu.memory_space<vmem>>, %arg5: memref<128x1xf32, #tpu.memory_space<vmem>>, %arg6: memref<1x1xf32, #tpu.memory_space<vmem>>, %arg7: memref<1x128x256xf32, #tpu.memory_space<vmem>>) attributes {dimension_semantics = [#tpu.dimension_semantics<parallel>, #tpu.dimension_semantics<parallel>], iteration_bounds = array<i64: 2, 1>, scalar_prefetch = 0 : i64, scratch_operands = 0 : i64, tpu.core_type = #tpu.core_type<tc>, window_params = [{transform_indices = @transform_0, window_bounds = array<i64: 1, 128, 256>}, {pipeline_mode = #tpu.pipeline_mode<synchronous>, transform_indices = @transform_1, window_bounds = array<i64: 128, 128>}, {pipeline_mode = #tpu.pipeline_mode<synchronous>, transform_indices = @transform_2, window_bounds = array<i64: 128, 1>}, {pipeline_mode = #tpu.pipeline_mode<synchronous>, transform_indices = @transform_3, window_bounds = array<i64: 128, 1>}, {pipeline_mode = #tpu.pipeline_mode<synchronous>, transform_indices = @transform_4, window_bounds = array<i64: 1, 1>}, {transform_indices = @transform_5, window_bounds = array<i64: 1, 128, 256>}]} {
    %c0 = arith.constant 0 : index
    %c0_0 = arith.constant 0 : index
    %c0_1 = arith.constant 0 : index
    %0 = vector.load %arg2[%c0, %c0_0, %c0_1] : memref<1x128x256xf32, #tpu.memory_space<vmem>>, vector<1x128x256xf32>
    %1 = vector.shape_cast %0 : vector<1x128x256xf32> to vector<128x256xf32>
    %c0_2 = arith.constant 0 : index
    %c0_3 = arith.constant 0 : index
    %2 = vector.load %arg3[%c0_2, %c0_3] : memref<128x128xbf16, #tpu.memory_space<vmem>>, vector<128x128xbf16>
    %3 = arith.truncf %1 : vector<128x256xf32> to vector<128x256xbf16>
    %cst = arith.constant dense<0.000000e+00> : vector<128x256xf32>
    %4 = tpu.matmul %2, %3, %cst {dimension_numbers = #tpu.dot_dimension_numbers<[1], [0], [0], [1], [0, 0, 1, 1], [], []>} : vector<128x128xbf16>, vector<128x256xbf16>, vector<128x256xf32> -> vector<128x256xf32>
    %c0_4 = arith.constant 0 : index
    %c0_5 = arith.constant 0 : index
    %5 = vector.load %arg4[%c0_4, %c0_5] : memref<128x1xf32, #tpu.memory_space<vmem>>, vector<128x1xf32>
    %6 = vector.broadcast %5 : vector<128x1xf32> to vector<128x256xf32>
    %7 = arith.addf %4, %6 : vector<128x256xf32>
    %cst_6 = arith.constant 0.000000e+00 : f32
    %8 = vector.broadcast %cst_6 : f32 to vector<128x256xf32>
    %9 = arith.maximumf %7, %8 : vector<128x256xf32>
    %c0_7 = arith.constant 0 : index
    %c0_8 = arith.constant 0 : index
    %10 = vector.load %arg5[%c0_7, %c0_8] : memref<128x1xf32, #tpu.memory_space<vmem>>, vector<128x1xf32>
    %11 = vector.broadcast %10 : vector<128x1xf32> to vector<128x256xf32>
    %12 = arith.mulf %9, %11 : vector<128x256xf32>
    %cst_9 = arith.constant dense<0.000000e+00> : vector<256xf32>
    %13 = vector.multi_reduction <add>, %12, %cst_9 [0] : vector<128x256xf32> to vector<256xf32>
    %14 = vector.shape_cast %13 : vector<256xf32> to vector<1x256xf32>
    %c0_10 = arith.constant 0 : index
    %c0_11 = arith.constant 0 : index
    %15 = vector.load %arg6[%c0_10, %c0_11] : memref<1x1xf32, #tpu.memory_space<vmem>>, vector<1x1xf32>
    %16 = vector.broadcast %15 : vector<1x1xf32> to vector<1x256xf32>
    %17 = arith.addf %14, %16 : vector<1x256xf32>
    %cst_12 = arith.constant 2.000000e+01 : f32
    %18 = vector.broadcast %cst_12 : f32 to vector<1x256xf32>
    %19 = arith.minimumf %17, %18 : vector<1x256xf32>
    %20 = math.exp %19 : vector<1x256xf32>
    %21 = math.log1p %20 : vector<1x256xf32>
    %cst_13 = arith.constant 2.000000e+01 : f32
    %22 = vector.broadcast %cst_13 : f32 to vector<1x256xf32>
    %23 = arith.cmpf ogt, %17, %22 : vector<1x256xf32>
    %24 = arith.select %23, %17, %21 : vector<1x256xi1>, vector<1x256xf32>
    %25 = arith.mulf %9, %9 : vector<128x256xf32>
    %cst_14 = arith.constant dense<0.000000e+00> : vector<256xf32>
    %26 = vector.multi_reduction <add>, %25, %cst_14 [0] : vector<128x256xf32> to vector<256xf32>
    %27 = vector.shape_cast %26 : vector<256xf32> to vector<1x256xf32>
    %cst_15 = arith.constant 1.000000e-24 : f32
    %28 = vector.broadcast %cst_15 : f32 to vector<1x256xf32>
    %29 = arith.maximumf %27, %28 : vector<1x256xf32>
    %30 = math.rsqrt %29 : vector<1x256xf32>
    %31 = arith.mulf %24, %30 : vector<1x256xf32>
    %32 = vector.broadcast %31 : vector<1x256xf32> to vector<128x256xf32>
    %33 = arith.mulf %9, %32 : vector<128x256xf32>
    %c0_16 = arith.constant 0 : index
    %c0_17 = arith.constant 0 : index
    %c0_18 = arith.constant 0 : index
    %34 = vector.load %arg7[%c0_16, %c0_17, %c0_18] : memref<1x128x256xf32, #tpu.memory_space<vmem>>, vector<1x128x256xf32>
    %35 = vector.shape_cast %34 : vector<1x128x256xf32> to vector<128x256xf32>
    %36 = vector.shape_cast %33 : vector<128x256xf32> to vector<1x128x256xf32>
    tpu.vector_store %arg7[%c0_16, %c0_17, %c0_18], %36 {strides = array<i32>} : memref<1x128x256xf32, #tpu.memory_space<vmem>>, vector<1x128x256xf32>,
    return
  }
  func.func @transform_0(%arg0: i32, %arg1: i32) -> (i32, i32, i32) {
    %c0_i32 = arith.constant 0 : i32
    %c0_i32_0 = arith.constant 0 : i32
    return %arg0, %c0_i32, %arg1 : i32, i32, i32
  }
  func.func @transform_1(%arg0: i32, %arg1: i32) -> (i32, i32) {
    %c0_i32 = arith.constant 0 : i32
    %c0_i32_0 = arith.constant 0 : i32
    %c0_i32_1 = arith.constant 0 : i32
    return %c0_i32, %c0_i32_0 : i32, i32
  }
  func.func @transform_2(%arg0: i32, %arg1: i32) -> (i32, i32) {
    %c0_i32 = arith.constant 0 : i32
    %c0_i32_0 = arith.constant 0 : i32
    %c0_i32_1 = arith.constant 0 : i32
    return %c0_i32, %c0_i32_0 : i32, i32
  }
  func.func @transform_3(%arg0: i32, %arg1: i32) -> (i32, i32) {
    %c0_i32 = arith.constant 0 : i32
    %c0_i32_0 = arith.constant 0 : i32
    %c0_i32_1 = arith.constant 0 : i32
    return %c0_i32, %c0_i32_0 : i32, i32
  }
  func.func @transform_4(%arg0: i32, %arg1: i32) -> (i32, i32) {
    %c0_i32 = arith.constant 0 : i32
    %c0_i32_0 = arith.constant 0 : i32
    %c0_i32_1 = arith.constant 0 : i32
    return %c0_i32, %c0_i32_0 : i32, i32
  }
  func.func @transform_5(%arg0: i32, %arg1: i32) -> (i32, i32, i32) {
    %c0_i32 = arith.constant 0 : i32
    %c0_i32_0 = arith.constant 0 : i32
    return %arg0, %c0_i32, %arg1 : i32, i32, i32
  }
}

</mosaic_0001>

<llo_original>
// kernel: spatial_attention_2d.1
$region0: #{spatial_attention_2d.1}
  #allocation0 [shape = 'u32[]', space=smem, size = 0x4, offset = 0x4, fixed_abs, tag = 'smem constant byte address 0x4 - core index']
  #allocation1 [shape = 'u32[144,128]{1,0:T(1,128)}', space=vmem, size = 0x12000, scoped, tag = 'internal scratch']
  #allocation2 [shape = 'f32[1,1]{1,0:T(1,128)S(1)}', space=vmem, size = 0x200, scoped, tag = 'scoped memory for spatial_attention_2d.1']
  %s0 = inlined_call_operand.vmem [shape: f32[2,128,256], index: 0, kind: input, shape index: {}]
  %s1 = inlined_call_operand.vmem [shape: bf16[128,128], index: 1, kind: input, shape index: {}]
  %s2 = inlined_call_operand.vmem [shape: f32[128,1], index: 2, kind: input, shape index: {}]
  %s3 = inlined_call_operand.vmem [shape: f32[128,1], index: 3, kind: input, shape index: {}]
  %s4 = inlined_call_operand.<no memory space> [shape: f32[1,1], index: 4, kind: input, shape index: {}]
  %s5 = inlined_call_operand.vmem [shape: f32[2,128,256], index: 5, kind: output, shape index: {}]
  %s6 = sld [smem:[#allocation0]]
  $region53: #{spatial_attention_2d.1} parent=0
    _
  %s8 = ssub.s32 1, %s6
  %s9 = scalar_select 0, %s8, %s6
  %v10 = vstv %s4
  %11 = vst [vmem:[#allocation2] sm:$0x1] %v10
  loop: start=0, step=1, limit=4
  $region2: #{spatial_attention_2d.1} parent=0 // loop_pre_header
    _
  $region3: #{spatial_attention_2d.1} parent=0 // loop_header
    %s13 = sphi 0, %s17
    %p14 = scmp.ge.s32.totalorder %s13, 4
    %s20 = sphi 0, %s32
    %s21 = sphi 0, %s28
    %s22 = sphi 0, %s20
    %s23 = sphi 0, %s21
    %s24 = sphi 0, %s22
    %s25 = sphi 0, %s23
    %s37 = sphi 0, %s39
    %s40 = sphi 0, %s37
    %s41 = sphi 0, %s40
    %s57 = sphi 0, %s41
    %s61 = sphi 0, %s61
    %s63 = sphi 0, %s61
    %s64 = sphi 0, %s63
    %s78 = sphi 0, %s64
    %s82 = sphi 0, %s82
    %s84 = sphi 0, %s82
    %s85 = sphi 0, %s84
    %s99 = sphi 0, %s85
    %s103 = sphi 0, %s103
    %s105 = sphi 0, %s103
    %s106 = sphi 0, %s105
    %s120 = sphi 0, %s106
    %s124 = sphi 0, %s124
    %s126 = sphi 0, %s124
    %s127 = sphi 0, %s126
    %s141 = sphi 0, %s127
    %s149 = sphi 0, %s151
    %s152 = sphi 0, %s149
    %s153 = sphi 0, %s152
    %s169 = sphi 0, %s153
  $region4: #{spatial_attention_2d.1} parent=0 // loop_header_branch
    %16 = sbr.rel (%p14) target = $region8
  $region5: #{spatial_attention_2d.1} parent=0 // loop_body
    %s18 = ssub.s32 %s13, 1
    %s19 = ssub.s32 %s13, 2
    %s26 = sadd.s32 1, %s21
    %p27 = scmp.ge.s32.totalorder %s26, 1
    %s28 = scalar_select %p27, 0, %s26
    %s29 = sadd.s32 1, %s20
    %s30 = scalar_select %p27, %s29, %s20
    %p31 = scmp.ge.s32.totalorder %s30, 2
    %s32 = scalar_select %p31, 0, %s30
    %s33 = ssub.s32 %s20, %s32
    %s34 = ssub.s32 %s21, %s28
    %s35 = sor.u32 %s33, %s34
    %p36 = scmp.eq.s32.totalorder %s35, 0
    %s38 = sadd.s32 %s37, 1
    %s39 = scalar_select %p36, %s37, %s38
    %p42 = pneg %p36
    %p43 = scmp.eq.s32.totalorder %s13, 1
    %p44 = por %p42, %p43
    %p45 = scmp.ne.s32.totalorder %s37, %s40
    %p46 = scmp.eq.s32.totalorder %s13, 0
    %p47 = por %p45, %p46
    %p48 = scmp.ne.s32.totalorder %s37, %s40
    %p49 = scmp.eq.s32.totalorder %s18, 1
    %p50 = por %p48, %p49
    %p51 = scmp.ne.s32.totalorder %s40, %s41
    %p52 = scmp.eq.s32.totalorder %s18, 0
    %p53 = por %p51, %p52
    %p54 = scmp.ne.s32.totalorder %s40, %s41
    %p55 = scmp.eq.s32.totalorder %s19, 1
    %p56 = por %p54, %p55
    %p58 = scmp.ne.s32.totalorder %s41, %s57
    %p59 = scmp.eq.s32.totalorder %s19, 0
    %p60 = por %p58, %p59
    %s62 = sadd.s32 %s61, 1
    %p65 = scmp.eq.s32.totalorder %s13, 1
    %p66 = scmp.ne.s32.totalorder %s61, %s63
    %p67 = scmp.eq.s32.totalorder %s13, 0
    %p68 = por %p66, %p67
    %p69 = scmp.ne.s32.totalorder %s61, %s63
    %p70 = scmp.eq.s32.totalorder %s18, 1
    %p71 = por %p69, %p70
    %p72 = scmp.ne.s32.totalorder %s63, %s64
    %p73 = scmp.eq.s32.totalorder %s18, 0
    %p74 = por %p72, %p73
    %p75 = scmp.ne.s32.totalorder %s63, %s64
    %p76 = scmp.eq.s32.totalorder %s19, 1
    %p77 = por %p75, %p76
    %p79 = scmp.ne.s32.totalorder %s64, %s78
    %p80 = scmp.eq.s32.totalorder %s19, 0
    %p81 = por %p79, %p80
    %s83 = sadd.s32 %s82, 1
    %p86 = scmp.eq.s32.totalorder %s13, 1
    %p87 = scmp.ne.s32.totalorder %s82, %s84
    %p88 = scmp.eq.s32.totalorder %s13, 0
    %p89 = por %p87, %p88
    %p90 = scmp.ne.s32.totalorder %s82, %s84
    %p91 = scmp.eq.s32.totalorder %s18, 1
    %p92 = por %p90, %p91
    %p93 = scmp.ne.s32.totalorder %s84, %s85
    %p94 = scmp.eq.s32.totalorder %s18, 0
    %p95 = por %p93, %p94
    %p96 = scmp.ne.s32.totalorder %s84, %s85
    %p97 = scmp.eq.s32.totalorder %s19, 1
    %p98 = por %p96, %p97
    %p100 = scmp.ne.s32.totalorder %s85, %s99
    %p101 = scmp.eq.s32.totalorder %s19, 0
    %p102 = por %p100, %p101
    %s104 = sadd.s32 %s103, 1
    %p107 = scmp.eq.s32.totalorder %s13, 1
    %p108 = scmp.ne.s32.totalorder %s103, %s105
    %p109 = scmp.eq.s32.totalorder %s13, 0
    %p110 = por %p108, %p109
    %p111 = scmp.ne.s32.totalorder %s103, %s105
    %p112 = scmp.eq.s32.totalorder %s18, 1
    %p113 = por %p111, %p112
    %p114 = scmp.ne.s32.totalorder %s105, %s106
    %p115 = scmp.eq.s32.totalorder %s18, 0
    %p116 = por %p114, %p115
    %p117 = scmp.ne.s32.totalorder %s105, %s106
    %p118 = scmp.eq.s32.totalorder %s19, 1
    %p119 = por %p117, %p118
    %p121 = scmp.ne.s32.totalorder %s106, %s120
    %p122 = scmp.eq.s32.totalorder %s19, 0
    %p123 = por %p121, %p122
    %s125 = sadd.s32 %s124, 1
    %p128 = scmp.eq.s32.totalorder %s13, 1
    %p129 = scmp.ne.s32.totalorder %s124, %s126
    %p130 = scmp.eq.s32.totalorder %s13, 0
    %p131 = por %p129, %p130
    %p132 = scmp.ne.s32.totalorder %s124, %s126
    %p133 = scmp.eq.s32.totalorder %s18, 1
    %p134 = por %p132, %p133
    %p135 = scmp.ne.s32.totalorder %s126, %s127
    %p136 = scmp.eq.s32.totalorder %s18, 0
    %p137 = por %p135, %p136
    %p138 = scmp.ne.s32.totalorder %s126, %s127
    %p139 = scmp.eq.s32.totalorder %s19, 1
    %p140 = por %p138, %p139
    %p142 = scmp.ne.s32.totalorder %s127, %s141
    %p143 = scmp.eq.s32.totalorder %s19, 0
    %p144 = por %p142, %p143
    %s145 = ssub.s32 %s20, %s32
    %s146 = ssub.s32 %s21, %s28
    %s147 = sor.u32 %s145, %s146
    %p148 = scmp.eq.s32.totalorder %s147, 0
    %s150 = sadd.s32 %s149, 1
    %s151 = scalar_select %p148, %s149, %s150
    %p154 = pneg %p148
    %p155 = scmp.eq.s32.totalorder %s13, 1
    %p156 = por %p154, %p155
    %p157 = scmp.ne.s32.totalorder %s149, %s152
    %p158 = scmp.eq.s32.totalorder %s13, 0
    %p159 = por %p157, %p158
    %p160 = scmp.ne.s32.totalorder %s149, %s152
    %p161 = scmp.eq.s32.totalorder %s18, 1
    %p162 = por %p160, %p161
    %p163 = scmp.ne.s32.totalorder %s152, %s153
    %p164 = scmp.eq.s32.totalorder %s18, 0
    %p165 = por %p163, %p164
    %p166 = scmp.ne.s32.totalorder %s152, %s153
    %p167 = scmp.eq.s32.totalorder %s19, 1
    %p168 = por %p166, %p167
    %p170 = scmp.ne.s32.totalorder %s153, %s169
    %p171 = scmp.eq.s32.totalorder %s19, 0
    %p172 = por %p170, %p171
    %p173 = scmp.le.s32.totalorder 1, %s13
    %p174 = scmp.lt.s32.totalorder %s13, 3
    %p175 = pnand %p173, %p174
    %p176 = pneg %p175
    // Predicated region
    $region9: #{spatial_attention_2d.1} parent=5 // pred_check
      _
    $region10: #{spatial_attention_2d.1} parent=5 // pred_check_branch
      %178 = sbr.rel (%p175) target = $region12
    $region11: #{spatial_attention_2d.1} parent=5 // pred_region
      %s179 = ssub.s32 %s13, 1
      // Predicated region
      $region13: #{spatial_attention_2d.1} parent=11 // pred_check
        %p180 = pneg %p74
      $region14: #{spatial_attention_2d.1} parent=11 // pred_check_branch
        %182 = sbr.rel (%p180) target = $region16
      $region15: #{spatial_attention_2d.1} parent=11 // pred_region
        _
      $region16: #{spatial_attention_2d.1} parent=11 // pred_fallthru
        _
      // Predicated region
      $region17: #{spatial_attention_2d.1} parent=11 // pred_check
        %p183 = pneg %p95
      $region18: #{spatial_attention_2d.1} parent=11 // pred_check_branch
        %185 = sbr.rel (%p183) target = $region20
      $region19: #{spatial_attention_2d.1} parent=11 // pred_region
        _
      $region20: #{spatial_attention_2d.1} parent=11 // pred_fallthru
        _
      // Predicated region
      $region21: #{spatial_attention_2d.1} parent=11 // pred_check
        %p186 = pneg %p116
      $region22: #{spatial_attention_2d.1} parent=11 // pred_check_branch
        %188 = sbr.rel (%p186) target = $region24
      $region23: #{spatial_attention_2d.1} parent=11 // pred_region
        _
      $region24: #{spatial_attention_2d.1} parent=11 // pred_fallthru
        _
      // Predicated region
      $region25: #{spatial_attention_2d.1} parent=11 // pred_check
        %p189 = pneg %p137
      $region26: #{spatial_attention_2d.1} parent=11 // pred_check_branch
        %191 = sbr.rel (%p189) target = $region28
      $region27: #{spatial_attention_2d.1} parent=11 // pred_region
        _
      $region28: #{spatial_attention_2d.1} parent=11 // pred_fallthru
        _
    $region12: #{spatial_attention_2d.1} parent=5 // pred_fallthru
      _
    %p192 = scmp.lt.s32.totalorder %s13, 2
    // Predicated region
    $region29: #{spatial_attention_2d.1} parent=5 // pred_check
      %p193 = pneg %p192
    $region30: #{spatial_attention_2d.1} parent=5 // pred_check_branch
      %195 = sbr.rel (%p193) target = $region32
    $region31: #{spatial_attention_2d.1} parent=5 // pred_region
      // Predicated region
      $region33: #{spatial_attention_2d.1} parent=31 // pred_check
        %p196 = pneg %p47
      $region34: #{spatial_attention_2d.1} parent=31 // pred_check_branch
        %198 = sbr.rel (%p196) target = $region36
      $region35: #{spatial_attention_2d.1} parent=31 // pred_region
        %s199 = smul.u32 2, %s21
        %p200 = scmp.lt.s32.totalorder %s20, 1
        %s201 = scalar_select %p200, %s20, 1
        %p202 = scmp.lt.s32.totalorder %s199, 1
        %s203 = scalar_select %p202, %s199, 1
        %s204 = smul.addr %s201, 32
        %s205 = sadd.s32 %s203, %s204
        %s206 = smul.addr %s205, 8
        %s207 = scalar_lea.vmem %s0, %s206
        %s208 = smul.u32 2, %s21
      $region36: #{spatial_attention_2d.1} parent=31 // pred_fallthru
        _
    $region32: #{spatial_attention_2d.1} parent=5 // pred_fallthru
      _
    %p209 = scmp.le.s32.totalorder 1, %s13
    %p210 = scmp.lt.s32.totalorder %s13, 3
    %p211 = pnand %p209, %p210
    %p212 = pneg %p211
    // Predicated region
    $region37: #{spatial_attention_2d.1} parent=5 // pred_check
      _
    $region38: #{spatial_attention_2d.1} parent=5 // pred_check_branch
      %214 = sbr.rel (%p211) target = $region40
    $region39: #{spatial_attention_2d.1} parent=5 // pred_region
      %s215 = ssub.s32 %s13, 1
      %s216 = smul.u32 2, %s23
      %p217 = scmp.lt.s32.totalorder %s22, 1
      %s218 = scalar_select %p217, %s22, 1
      %p219 = scmp.lt.s32.totalorder %s216, 1
      %s220 = scalar_select %p219, %s216, 1
      %s221 = smul.addr %s218, 32
      %s222 = sadd.s32 %s220, %s221
      %s223 = smul.addr %s222, 8
      %s224 = scalar_lea.vmem %s0, %s223
      %p225 = pneg %p53
      %p226 = pneg %p50
      %p227 = pneg %p74
      %p228 = pneg %p71
      %p229 = pneg %p95
      %p230 = pneg %p92
      %p231 = pneg %p116
      %p232 = pneg %p113
      %p233 = pneg %p137
      %p234 = pneg %p134
      %p235 = pneg %p165
      %p236 = pneg %p162
      %s237 = smul.u32 2, %s23
      %p238 = scmp.lt.s32.totalorder %s22, 1
      %s239 = scalar_select %p238, %s22, 1
      %p240 = scmp.lt.s32.totalorder %s237, 1
      %s241 = scalar_select %p240, %s237, 1
      %s242 = smul.addr %s239, 32
      %s243 = sadd.s32 %s241, %s242
      %s244 = smul.addr %s243, 8
      %s245 = scalar_lea.vmem %s5, %s244
      %s246 = smul.u32 2, %s23
      %p247 = scmp.lt.s32.totalorder %s22, 1
      %s248 = scalar_select %p247, %s22, 1
      %p249 = scmp.lt.s32.totalorder %s246, 1
      %s250 = scalar_select %p249, %s246, 1
      %s251 = smul.addr %s248, 32
      %s252 = sadd.s32 %s250, %s251
      %s253 = smul.addr %s252, 8
      %s254 = scalar_lea.vmem %s0, %s253
      %s255 = smul.u32 2, %s23
      %s256 = smul.u32 2, %s23
      %p257 = scmp.lt.s32.totalorder %s22, 1
      %s258 = scalar_select %p257, %s22, 1
      %p259 = scmp.lt.s32.totalorder %s256, 1
      %s260 = scalar_select %p259, %s256, 1
      %s261 = smul.addr %s258, 32
      %s262 = sadd.s32 %s260, %s261
      %s263 = smul.addr %s262, 8
      %s264 = scalar_lea.vmem %s5, %s263
      %s265 = smul.u32 2, %s23
      %v267 = vld [vmem:[%s254] sm:$0xff]
      %v268 = vld [vmem:[%s254 + $0x8] sm:$0xff]
      %v269 = vld [vmem:[%s254 + $0x10] sm:$0xff]
      %v270 = vld [vmem:[%s254 + $0x18] sm:$0xff]
      %v271 = vld [vmem:[%s254 + $0x20] sm:$0xff]
      %v272 = vld [vmem:[%s254 + $0x28] sm:$0xff]
      %v273 = vld [vmem:[%s254 + $0x30] sm:$0xff]
      %v274 = vld [vmem:[%s254 + $0x38] sm:$0xff]
      %v275 = vld [vmem:[%s254 + $0x40] sm:$0xff]
      %v276 = vld [vmem:[%s254 + $0x48] sm:$0xff]
      %v277 = vld [vmem:[%s254 + $0x50] sm:$0xff]
      %v278 = vld [vmem:[%s254 + $0x58] sm:$0xff]
      %v279 = vld [vmem:[%s254 + $0x60] sm:$0xff]
      %v280 = vld [vmem:[%s254 + $0x68] sm:$0xff]
      %v281 = vld [vmem:[%s254 + $0x70] sm:$0xff]
      %v282 = vld [vmem:[%s254 + $0x78] sm:$0xff]
      %v283 = vld [vmem:[%s254 + $0x80] sm:$0xff]
      %v284 = vld [vmem:[%s254 + $0x88] sm:$0xff]
      %v285 = vld [vmem:[%s254 + $0x90] sm:$0xff]
      %v286 = vld [vmem:[%s254 + $0x98] sm:$0xff]
      %v287 = vld [vmem:[%s254 + $0xa0] sm:$0xff]
      %v288 = vld [vmem:[%s254 + $0xa8] sm:$0xff]
      %v289 = vld [vmem:[%s254 + $0xb0] sm:$0xff]
      %v290 = vld [vmem:[%s254 + $0xb8] sm:$0xff]
      %v291 = vld [vmem:[%s254 + $0xc0] sm:$0xff]
      %v292 = vld [vmem:[%s254 + $0xc8] sm:$0xff]
      %v293 = vld [vmem:[%s254 + $0xd0] sm:$0xff]
      %v294 = vld [vmem:[%s254 + $0xd8] sm:$0xff]
      %v295 = vld [vmem:[%s254 + $0xe0] sm:$0xff]
      %v296 = vld [vmem:[%s254 + $0xe8] sm:$0xff]
      %v297 = vld [vmem:[%s254 + $0xf0] sm:$0xff]
      %v298 = vld [vmem:[%s254 + $0xf8] sm:$0xff]
      %v299 = vld [vmem:[%s1] sm:$0xf]
      %v300 = vld [vmem:[%s1 + $0x4] sm:$0xf]
      %v301 = vld [vmem:[%s1 + $0x8] sm:$0xf]
      %v302 = vld [vmem:[%s1 + $0xc] sm:$0xf]
      %v303 = vld [vmem:[%s1 + $0x10] sm:$0xf]
      %v304 = vld [vmem:[%s1 + $0x14] sm:$0xf]
      %v305 = vld [vmem:[%s1 + $0x18] sm:$0xf]
      %v306 = vld [vmem:[%s1 + $0x1c] sm:$0xf]
      %v307 = vld [vmem:[%s1 + $0x20] sm:$0xf]
      %v308 = vld [vmem:[%s1 + $0x24] sm:$0xf]
      %v309 = vld [vmem:[%s1 + $0x28] sm:$0xf]
      %v310 = vld [vmem:[%s1 + $0x2c] sm:$0xf]
      %v311 = vld [vmem:[%s1 + $0x30] sm:$0xf]
      %v312 = vld [vmem:[%s1 + $0x34] sm:$0xf]
      %v313 = vld [vmem:[%s1 + $0x38] sm:$0xf]
      %v314 = vld [vmem:[%s1 + $0x3c] sm:$0xf]
      %v315 = vpack.c.bf16 %v269, %v267
      %v316 = vpack.c.bf16 %v270, %v268
      %v317 = vpack.c.bf16 %v273, %v271
      %v318 = vpack.c.bf16 %v274, %v272
      %v319 = vpack.c.bf16 %v277, %v275
      %v320 = vpack.c.bf16 %v278, %v276
      %v321 = vpack.c.bf16 %v281, %v279
      %v322 = vpack.c.bf16 %v282, %v280
      %v323 = vpack.c.bf16 %v285, %v283
      %v324 = vpack.c.bf16 %v286, %v284
      %v325 = vpack.c.bf16 %v289, %v287
      %v326 = vpack.c.bf16 %v290, %v288
      %v327 = vpack.c.bf16 %v293, %v291
      %v328 = vpack.c.bf16 %v294, %v292
      %v329 = vpack.c.bf16 %v297, %v295
      %v330 = vpack.c.bf16 %v298, %v296
      %v331 = vld [vmem:[%s2] sm:$0xff]
      %v332 = vld [vmem:[%s2 + $0x8] sm:$0xff]
      %v333 = vld [vmem:[%s2 + $0x10] sm:$0xff]
      %v334 = vld [vmem:[%s2 + $0x18] sm:$0xff]
      %v335 = vld [vmem:[%s2 + $0x20] sm:$0xff]
      %v336 = vld [vmem:[%s2 + $0x28] sm:$0xff]
      %v337 = vld [vmem:[%s2 + $0x30] sm:$0xff]
      %v338 = vld [vmem:[%s2 + $0x38] sm:$0xff]
      %v339 = vld [vmem:[%s2 + $0x40] sm:$0xff]
      %v340 = vld [vmem:[%s2 + $0x48] sm:$0xff]
      %v341 = vld [vmem:[%s2 + $0x50] sm:$0xff]
      %v342 = vld [vmem:[%s2 + $0x58] sm:$0xff]
      %v343 = vld [vmem:[%s2 + $0x60] sm:$0xff]
      %v344 = vld [vmem:[%s2 + $0x68] sm:$0xff]
      %v345 = vld [vmem:[%s2 + $0x70] sm:$0xff]
      %v346 = vld [vmem:[%s2 + $0x78] sm:$0xff]
      %348 = vset.pattern.permute.xlu0 0
      %349 = vperm.xlu0 %348, %v331
      %v350 = vpop.permute.xlu0 %349
      %353 = vset.pattern.permute.xlu0 0
      %354 = vperm.xlu0 %353, %v332
      %v355 = vpop.permute.xlu0 %354
      %358 = vset.pattern.permute.xlu0 0
      %359 = vperm.xlu0 %358, %v333
      %v360 = vpop.permute.xlu0 %359
      %363 = vset.pattern.permute.xlu0 0
      %364 = vperm.xlu0 %363, %v334
      %v365 = vpop.permute.xlu0 %364
      %368 = vset.pattern.permute.xlu0 0
      %369 = vperm.xlu0 %368, %v335
      %v370 = vpop.permute.xlu0 %369
      %373 = vset.pattern.permute.xlu0 0
      %374 = vperm.xlu0 %373, %v336
      %v375 = vpop.permute.xlu0 %374
      %378 = vset.pattern.permute.xlu0 0
      %379 = vperm.xlu0 %378, %v337
      %v380 = vpop.permute.xlu0 %379
      %383 = vset.pattern.permute.xlu0 0
      %384 = vperm.xlu0 %383, %v338
      %v385 = vpop.permute.xlu0 %384
      %388 = vset.pattern.permute.xlu0 0
      %389 = vperm.xlu0 %388, %v339
      %v390 = vpop.permute.xlu0 %389
      %393 = vset.pattern.permute.xlu0 0
      %394 = vperm.xlu0 %393, %v340
      %v395 = vpop.permute.xlu0 %394
      %398 = vset.pattern.permute.xlu0 0
      %399 = vperm.xlu0 %398, %v341
      %v400 = vpop.permute.xlu0 %399
      %403 = vset.pattern.permute.xlu0 0
      %404 = vperm.xlu0 %403, %v342
      %v405 = vpop.permute.xlu0 %404
      %408 = vset.pattern.permute.xlu0 0
      %409 = vperm.xlu0 %408, %v343
      %v410 = vpop.permute.xlu0 %409
      %413 = vset.pattern.permute.xlu0 0
      %414 = vperm.xlu0 %413, %v344
      %v415 = vpop.permute.xlu0 %414
      %418 = vset.pattern.permute.xlu0 0
      %419 = vperm.xlu0 %418, %v345
      %v420 = vpop.permute.xlu0 %419
      %423 = vset.pattern.permute.xlu0 0
      %424 = vperm.xlu0 %423, %v346
      %v425 = vpop.permute.xlu0 %424
      %v443 = vunpack.c.l.b16 %v299
      %v444 = vunpack.c.l.b16 %v300
      %v445 = vunpack.c.l.b16 %v301
      %v446 = vunpack.c.l.b16 %v302
      %v447 = vunpack.c.l.b16 %v303
      %v448 = vunpack.c.l.b16 %v304
      %v449 = vunpack.c.l.b16 %v305
      %v450 = vunpack.c.l.b16 %v306
      %v451 = vunpack.c.l.b16 %v307
      %v452 = vunpack.c.l.b16 %v308
      %v453 = vunpack.c.l.b16 %v309
      %v454 = vunpack.c.l.b16 %v310
      %v455 = vunpack.c.l.b16 %v311
      %v456 = vunpack.c.l.b16 %v312
      %v457 = vunpack.c.l.b16 %v313
      %v458 = vunpack.c.l.b16 %v314
      %v459 = vpack.c.b16 %v444, %v443
      %v460 = vpack.c.b16 %v446, %v445
      %v461 = vpack.c.b16 %v448, %v447
      %v462 = vpack.c.b16 %v450, %v449
      %v463 = vpack.c.b16 %v452, %v451
      %v464 = vpack.c.b16 %v454, %v453
      %v465 = vpack.c.b16 %v456, %v455
      %v466 = vpack.c.b16 %v458, %v457
      %475 = vmatprep.subr.bf16.mxu0 %v330
      %476 = vmatpush1.bf16.msra.mxu0 %v329
      %477 = vmatprep.subr.bf16.mxu0 %v328
      %478 = vmatpush1.bf16.msra.mxu0 %v327
      %479 = vmatprep.subr.bf16.mxu0 %v326
      %480 = vmatpush1.bf16.msra.mxu0 %v325
      %481 = vmatprep.subr.bf16.mxu0 %v324
      %482 = vmatpush1.bf16.msra.mxu0 %v323
      %483 = vmatprep.subr.bf16.mxu0 %v322
      %484 = vmatpush1.bf16.msra.mxu0 %v321
      %485 = vmatprep.subr.bf16.mxu0 %v320
      %486 = vmatpush1.bf16.msra.mxu0 %v319
      %487 = vmatprep.subr.bf16.mxu0 %v318
      %488 = vmatpush1.bf16.msra.mxu0 %v317
      %489 = vmatprep.subr.bf16.mxu0 %v316
      %490 = vmatpush1.bf16.msra.mxu0 %v315
      %491 = vmatprep.subr.bf16.mxu0 0
      %492 = vmatpush2.bf16.msra.mxu0 0
      %493 = vmatprep.subr.bf16.mxu0 0
      %494 = vmatpush2.bf16.msra.mxu0 0
      %495 = vmatprep.subr.bf16.mxu0 0
      %496 = vmatpush2.bf16.msra.mxu0 0
      %497 = vmatprep.subr.bf16.mxu0 0
      %498 = vmatpush2.bf16.msra.mxu0 0
      %499 = vmatprep.subr.bf16.mxu0 0
      %500 = vmatpush2.bf16.msra.mxu0 0
      %501 = vmatprep.subr.bf16.mxu0 0
      %502 = vmatpush2.bf16.msra.mxu0 0
      %503 = vmatprep.subr.bf16.mxu0 0
      %504 = vmatpush2.bf16.msra.mxu0 0
      %505 = vmatprep.subr.bf16.mxu0 0
      %506 = vmatpush2.bf16.msra.mxu0 0
      %507 = vmatprep.mubr.bf16.mxu0 0
      %508 = vmatmul.mubr.bf16.gmra.mxu0 %v459
      %v509 = vpop.f32.mrf.mxu0
      %v510 = vadd.f32 %v350, %v509
      %v511 = vpop.f32.mrf.mxu0
      %v512 = vadd.f32 %v350, %v511
      %v513 = vpop.f32.mrf.mxu0
      %v514 = vadd.f32 %v355, %v513
      %v515 = vpop.f32.mrf.mxu0
      %v516 = vadd.f32 %v355, %v515
      %517 = vmatprep.mubr.bf16.mxu0 0
      %518 = vmatmul.mubr.bf16.gmra.mxu0 %v460
      %v519 = vpop.f32.mrf.mxu0
      %v520 = vadd.f32 %v360, %v519
      %v521 = vpop.f32.mrf.mxu0
      %v522 = vadd.f32 %v360, %v521
      %v523 = vpop.f32.mrf.mxu0
      %v524 = vadd.f32 %v365, %v523
      %v525 = vpop.f32.mrf.mxu0
      %v526 = vadd.f32 %v365, %v525
      %527 = vmatprep.mubr.bf16.mxu0 0
      %528 = vmatmul.mubr.bf16.gmra.mxu0 %v461
      %v529 = vpop.f32.mrf.mxu0
      %v530 = vadd.f32 %v370, %v529
      %v531 = vpop.f32.mrf.mxu0
      %v532 = vadd.f32 %v370, %v531
      %v533 = vpop.f32.mrf.mxu0
      %v534 = vadd.f32 %v375, %v533
      %v535 = vpop.f32.mrf.mxu0
      %v536 = vadd.f32 %v375, %v535
      %537 = vmatprep.mubr.bf16.mxu0 0
      %538 = vmatmul.mubr.bf16.gmra.mxu0 %v462
      %v539 = vpop.f32.mrf.mxu0
      %v540 = vadd.f32 %v380, %v539
      %v541 = vpop.f32.mrf.mxu0
      %v542 = vadd.f32 %v380, %v541
      %v543 = vpop.f32.mrf.mxu0
      %v544 = vadd.f32 %v385, %v543
      %v545 = vpop.f32.mrf.mxu0
      %v546 = vadd.f32 %v385, %v545
      %547 = vmatprep.mubr.bf16.mxu0 0
      %548 = vmatmul.mubr.bf16.gmra.mxu0 %v463
      %v549 = vpop.f32.mrf.mxu0
      %v550 = vadd.f32 %v390, %v549
      %v551 = vpop.f32.mrf.mxu0
      %v552 = vadd.f32 %v390, %v551
      %v553 = vpop.f32.mrf.mxu0
      %v554 = vadd.f32 %v395, %v553
      %v555 = vpop.f32.mrf.mxu0
      %v556 = vadd.f32 %v395, %v555
      %557 = vmatprep.mubr.bf16.mxu0 0
      %558 = vmatmul.mubr.bf16.gmra.mxu0 %v464
      %v559 = vpop.f32.mrf.mxu0
      %v560 = vadd.f32 %v400, %v559
      %v561 = vpop.f32.mrf.mxu0
      %v562 = vadd.f32 %v400, %v561
      %v563 = vpop.f32.mrf.mxu0
      %v564 = vadd.f32 %v405, %v563
      %v565 = vpop.f32.mrf.mxu0
      %v566 = vadd.f32 %v405, %v565
      %567 = vmatprep.mubr.bf16.mxu0 0
      %568 = vmatmul.mubr.bf16.gmra.mxu0 %v465
      %v569 = vpop.f32.mrf.mxu0
      %v570 = vadd.f32 %v410, %v569
      %v571 = vpop.f32.mrf.mxu0
      %v572 = vadd.f32 %v410, %v571
      %v573 = vpop.f32.mrf.mxu0
      %v574 = vadd.f32 %v415, %v573
      %v575 = vpop.f32.mrf.mxu0
      %v576 = vadd.f32 %v415, %v575
      %577 = vmatprep.mubr.bf16.mxu0 0
      %578 = vmatmul.mubr.bf16.gmra.mxu0 %v466
      %v579 = vpop.f32.mrf.mxu0
      %v580 = vadd.f32 %v420, %v579
      %v581 = vpop.f32.mrf.mxu0
      %v582 = vadd.f32 %v420, %v581
      %v583 = vpop.f32.mrf.mxu0
      %v584 = vadd.f32 %v425, %v583
      %v585 = vpop.f32.mrf.mxu0
      %v586 = vadd.f32 %v425, %v585
      %587 = vdwg.mxu0
      %v588 = vmax.f32 %v510, 0.0
      %v589 = vmax.f32 %v512, 0.0
      %v590 = vmax.f32 %v514, 0.0
      %v591 = vmax.f32 %v516, 0.0
      %v592 = vmax.f32 %v520, 0.0
      %v593 = vmax.f32 %v522, 0.0
      %v594 = vmax.f32 %v524, 0.0
      %v595 = vmax.f32 %v526, 0.0
      %v596 = vmax.f32 %v530, 0.0
      %v597 = vmax.f32 %v532, 0.0
      %v598 = vmax.f32 %v534, 0.0
      %v599 = vmax.f32 %v536, 0.0
      %v600 = vmax.f32 %v540, 0.0
      %v601 = vmax.f32 %v542, 0.0
      %v602 = vmax.f32 %v544, 0.0
      %v603 = vmax.f32 %v546, 0.0
      %v604 = vmax.f32 %v550, 0.0
      %v605 = vmax.f32 %v552, 0.0
      %v606 = vmax.f32 %v554, 0.0
      %v607 = vmax.f32 %v556, 0.0
      %v608 = vmax.f32 %v560, 0.0
      %v609 = vmax.f32 %v562, 0.0
      %v610 = vmax.f32 %v564, 0.0
      %v611 = vmax.f32 %v566, 0.0
      %v612 = vmax.f32 %v570, 0.0
      %v613 = vmax.f32 %v572, 0.0
      %v614 = vmax.f32 %v574, 0.0
      %v615 = vmax.f32 %v576, 0.0
      %v616 = vmax.f32 %v580, 0.0
      %v617 = vmax.f32 %v582, 0.0
      %v618 = vmax.f32 %v584, 0.0
      %v619 = vmax.f32 %v586, 0.0
      %v620 = vld [vmem:[%s3] sm:$0xff]
      %v621 = vld [vmem:[%s3 + $0x8] sm:$0xff]
      %v622 = vld [vmem:[%s3 + $0x10] sm:$0xff]
      %v623 = vld [vmem:[%s3 + $0x18] sm:$0xff]
      %v624 = vld [vmem:[%s3 + $0x20] sm:$0xff]
      %v625 = vld [vmem:[%s3 + $0x28] sm:$0xff]
      %v626 = vld [vmem:[%s3 + $0x30] sm:$0xff]
      %v627 = vld [vmem:[%s3 + $0x38] sm:$0xff]
      %v628 = vld [vmem:[%s3 + $0x40] sm:$0xff]
      %v629 = vld [vmem:[%s3 + $0x48] sm:$0xff]
      %v630 = vld [vmem:[%s3 + $0x50] sm:$0xff]
      %v631 = vld [vmem:[%s3 + $0x58] sm:$0xff]
      %v632 = vld [vmem:[%s3 + $0x60] sm:$0xff]
      %v633 = vld [vmem:[%s3 + $0x68] sm:$0xff]
      %v634 = vld [vmem:[%s3 + $0x70] sm:$0xff]
      %v635 = vld [vmem:[%s3 + $0x78] sm:$0xff]
      %637 = vset.pattern.permute.xlu0 0
      %638 = vperm.xlu0 %637, %v620
      %v639 = vpop.permute.xlu0 %638
      %642 = vset.pattern.permute.xlu0 0
      %643 = vperm.xlu0 %642, %v621
      %v644 = vpop.permute.xlu0 %643
      %647 = vset.pattern.permute.xlu0 0
      %648 = vperm.xlu0 %647, %v622
      %v649 = vpop.permute.xlu0 %648
      %652 = vset.pattern.permute.xlu0 0
      %653 = vperm.xlu0 %652, %v623
      %v654 = vpop.permute.xlu0 %653
      %657 = vset.pattern.permute.xlu0 0
      %658 = vperm.xlu0 %657, %v624
      %v659 = vpop.permute.xlu0 %658
      %662 = vset.pattern.permute.xlu0 0
      %663 = vperm.xlu0 %662, %v625
      %v664 = vpop.permute.xlu0 %663
      %667 = vset.pattern.permute.xlu0 0
      %668 = vperm.xlu0 %667, %v626
      %v669 = vpop.permute.xlu0 %668
      %672 = vset.pattern.permute.xlu0 0
      %673 = vperm.xlu0 %672, %v627
      %v674 = vpop.permute.xlu0 %673
      %677 = vset.pattern.permute.xlu0 0
      %678 = vperm.xlu0 %677, %v628
      %v679 = vpop.permute.xlu0 %678
      %682 = vset.pattern.permute.xlu0 0
      %683 = vperm.xlu0 %682, %v629
      %v684 = vpop.permute.xlu0 %683
      %687 = vset.pattern.permute.xlu0 0
      %688 = vperm.xlu0 %687, %v630
      %v689 = vpop.permute.xlu0 %688
      %692 = vset.pattern.permute.xlu0 0
      %693 = vperm.xlu0 %692, %v631
      %v694 = vpop.permute.xlu0 %693
      %697 = vset.pattern.permute.xlu0 0
      %698 = vperm.xlu0 %697, %v632
      %v699 = vpop.permute.xlu0 %698
      %702 = vset.pattern.permute.xlu0 0
      %703 = vperm.xlu0 %702, %v633
      %v704 = vpop.permute.xlu0 %703
      %707 = vset.pattern.permute.xlu0 0
      %708 = vperm.xlu0 %707, %v634
      %v709 = vpop.permute.xlu0 %708
      %712 = vset.pattern.permute.xlu0 0
      %713 = vperm.xlu0 %712, %v635
      %v714 = vpop.permute.xlu0 %713
      %v716 = vmul.f32 %v588, %v639
      %v717 = vmul.f32 %v589, %v639
      %v718 = vmul.f32 %v590, %v644
      %v719 = vmul.f32 %v591, %v644
      %v720 = vmul.f32 %v592, %v649
      %v721 = vmul.f32 %v593, %v649
      %v722 = vmul.f32 %v594, %v654
      %v723 = vmul.f32 %v595, %v654
      %v724 = vmul.f32 %v596, %v659
      %v725 = vmul.f32 %v597, %v659
      %v726 = vmul.f32 %v598, %v664
      %v727 = vmul.f32 %v599, %v664
      %v728 = vmul.f32 %v600, %v669
      %v729 = vmul.f32 %v601, %v669
      %v730 = vmul.f32 %v602, %v674
      %v731 = vmul.f32 %v603, %v674
      %v732 = vmul.f32 %v604, %v679
      %v733 = vmul.f32 %v605, %v679
      %v734 = vmul.f32 %v606, %v684
      %v735 = vmul.f32 %v607, %v684
      %v736 = vmul.f32 %v608, %v689
      %v737 = vmul.f32 %v609, %v689
      %v738 = vmul.f32 %v610, %v694
      %v739 = vmul.f32 %v611, %v694
      %v740 = vmul.f32 %v612, %v699
      %v741 = vmul.f32 %v613, %v699
      %v742 = vmul.f32 %v614, %v704
      %v743 = vmul.f32 %v615, %v704
      %v744 = vmul.f32 %v616, %v709
      %v745 = vmul.f32 %v617, %v709
      %v746 = vmul.f32 %v618, %v714
      %v747 = vmul.f32 %v619, %v714
      %v748 = vadd.f32 %v716, %v718
      %v749 = vadd.f32 %v748, %v720
      %v750 = vadd.f32 %v749, %v722
      %v751 = vadd.f32 %v750, %v724
      %v752 = vadd.f32 %v751, %v726
      %v753 = vadd.f32 %v752, %v728
      %v754 = vadd.f32 %v753, %v730
      %v755 = vadd.f32 %v754, %v732
      %v756 = vadd.f32 %v755, %v734
      %v757 = vadd.f32 %v756, %v736
      %v758 = vadd.f32 %v757, %v738
      %v759 = vadd.f32 %v758, %v740
      %v760 = vadd.f32 %v759, %v742
      %v761 = vadd.f32 %v760, %v744
      %v762 = vadd.f32 %v761, %v746
      %v763 = vrot.slane %v762, 4
      %v764 = vadd.f32 %v762, %v763
      %v765 = vrot.slane %v764, 2
      %v766 = vadd.f32 %v764, %v765
      %v767 = vrot.slane %v766, 1
      %v768 = vadd.f32 %v766, %v767
      %v769 = vadd.f32 %v717, %v719
      %v770 = vadd.f32 %v769, %v721
      %v771 = vadd.f32 %v770, %v723
      %v772 = vadd.f32 %v771, %v725
      %v773 = vadd.f32 %v772, %v727
      %v774 = vadd.f32 %v773, %v729
      %v775 = vadd.f32 %v774, %v731
      %v776 = vadd.f32 %v775, %v733
      %v777 = vadd.f32 %v776, %v735
      %v778 = vadd.f32 %v777, %v737
      %v779 = vadd.f32 %v778, %v739
      %v780 = vadd.f32 %v779, %v741
      %v781 = vadd.f32 %v780, %v743
      %v782 = vadd.f32 %v781, %v745
      %v783 = vadd.f32 %v782, %v747
      %v784 = vrot.slane %v783, 4
      %v785 = vadd.f32 %v783, %v784
      %v786 = vrot.slane %v785, 2
      %v787 = vadd.f32 %v785, %v786
      %v788 = vrot.slane %v787, 1
      %v789 = vadd.f32 %v787, %v788
      %v790 = vld [vmem:[#allocation2] sm:$0x1]
      %792 = vset.pattern.permute.xlu0 0
      %793 = vperm.xlu0 %792, %v790
      %v794 = vpop.permute.xlu0 %793
      %v796 = vlaneseq
      %v797 = vshrl.u32 %v796, 7
      %v798 = vsub.s32 0, %v797
      %v799 = vrot.slane %v794, %v798
      %v800 = vadd.f32 %v768, %v799
      %v801 = vadd.f32 %v789, %v799
      %v802 = vmin.f32 %v800, 20.0
      %v803 = vmin.f32 %v801, 20.0
      %v804 = vmul.f32 %v802, 1.442695
      %v805 = vpow.pop %v804
      %v806 = vmul.f32 %v803, 1.442695
      %v807 = vpow.pop %v806
      %v808 = vadd.f32 %v805, 1.0
      %v809 = vlog2.pop %v808
      %v810 = vmul.f32 %v809, 0.6931472
      %v811 = vmul.f32 -0.5, %v805
      %v812 = vadd.f32 %v811, 1.0
      %v813 = vmul.f32 %v812, %v805
      %v814 = vand.u32 2147483647, %v805
      %vm815 = vcmp.lt.f32.partialorder %v814, 0.0004427343
      %v816 = vsel %vm815, %v813, %v810
      %v817 = vadd.f32 %v807, 1.0
      %v818 = vlog2.pop %v817
      %v819 = vmul.f32 %v818, 0.6931472
      %v820 = vmul.f32 -0.5, %v807
      %v821 = vadd.f32 %v820, 1.0
      %v822 = vmul.f32 %v821, %v807
      %v823 = vand.u32 2147483647, %v807
      %vm824 = vcmp.lt.f32.partialorder %v823, 0.0004427343
      %v825 = vsel %vm824, %v822, %v819
      %vm826 = vcmp.gt.f32.partialorder %v800, 20.0
      %vm827 = vcmp.gt.f32.partialorder %v801, 20.0
      %v828 = vsel %vm826, %v800, %v816
      %v829 = vsel %vm827, %v801, %v825
      %v830 = vmul.f32 %v588, %v588
      %v831 = vmul.f32 %v589, %v589
      %v832 = vmul.f32 %v590, %v590
      %v833 = vmul.f32 %v591, %v591
      %v834 = vmul.f32 %v592, %v592
      %v835 = vmul.f32 %v593, %v593
      %v836 = vmul.f32 %v594, %v594
      %v837 = vmul.f32 %v595, %v595
      %v838 = vmul.f32 %v596, %v596
      %v839 = vmul.f32 %v597, %v597
      %v840 = vmul.f32 %v598, %v598
      %v841 = vmul.f32 %v599, %v599
      %v842 = vmul.f32 %v600, %v600
      %v843 = vmul.f32 %v601, %v601
      %v844 = vmul.f32 %v602, %v602
      %v845 = vmul.f32 %v603, %v603
      %v846 = vmul.f32 %v604, %v604
      %v847 = vmul.f32 %v605, %v605
      %v848 = vmul.f32 %v606, %v606
      %v849 = vmul.f32 %v607, %v607
      %v850 = vmul.f32 %v608, %v608
      %v851 = vmul.f32 %v609, %v609
      %v852 = vmul.f32 %v610, %v610
      %v853 = vmul.f32 %v611, %v611
      %v854 = vmul.f32 %v612, %v612
      %v855 = vmul.f32 %v613, %v613
      %v856 = vmul.f32 %v614, %v614
      %v857 = vmul.f32 %v615, %v615
      %v858 = vmul.f32 %v616, %v616
      %v859 = vmul.f32 %v617, %v617
      %v860 = vmul.f32 %v618, %v618
      %v861 = vmul.f32 %v619, %v619
      %v862 = vadd.f32 %v830, %v832
      %v863 = vadd.f32 %v862, %v834
      %v864 = vadd.f32 %v863, %v836
      %v865 = vadd.f32 %v864, %v838
      %v866 = vadd.f32 %v865, %v840
      %v867 = vadd.f32 %v866, %v842
      %v868 = vadd.f32 %v867, %v844
      %v869 = vadd.f32 %v868, %v846
      %v870 = vadd.f32 %v869, %v848
      %v871 = vadd.f32 %v870, %v850
      %v872 = vadd.f32 %v871, %v852
      %v873 = vadd.f32 %v872, %v854
      %v874 = vadd.f32 %v873, %v856
      %v875 = vadd.f32 %v874, %v858
      %v876 = vadd.f32 %v875, %v860
      %v877 = vrot.slane %v876, 4
      %v878 = vadd.f32 %v876, %v877
      %v879 = vrot.slane %v878, 2
      %v880 = vadd.f32 %v878, %v879
      %v881 = vrot.slane %v880, 1
      %v882 = vadd.f32 %v880, %v881
      %v883 = vadd.f32 %v831, %v833
      %v884 = vadd.f32 %v883, %v835
      %v885 = vadd.f32 %v884, %v837
      %v886 = vadd.f32 %v885, %v839
      %v887 = vadd.f32 %v886, %v841
      %v888 = vadd.f32 %v887, %v843
      %v889 = vadd.f32 %v888, %v845
      %v890 = vadd.f32 %v889, %v847
      %v891 = vadd.f32 %v890, %v849
      %v892 = vadd.f32 %v891, %v851
      %v893 = vadd.f32 %v892, %v853
      %v894 = vadd.f32 %v893, %v855
      %v895 = vadd.f32 %v894, %v857
      %v896 = vadd.f32 %v895, %v859
      %v897 = vadd.f32 %v896, %v861
      %v898 = vrot.slane %v897, 4
      %v899 = vadd.f32 %v897, %v898
      %v900 = vrot.slane %v899, 2
      %v901 = vadd.f32 %v899, %v900
      %v902 = vrot.slane %v901, 1
      %v903 = vadd.f32 %v901, %v902
      %v904 = vmax.f32 %v882, 1e-24
      %v905 = vmax.f32 %v903, 1e-24
      %v906 = vrsqrt.pop %v904
      %v907 = vrsqrt.pop %v905
      %v908 = vmul.f32 %v828, %v906
      %v909 = vmul.f32 %v829, %v907
      %v910 = vmul.f32 %v588, %v908
      %v911 = vmul.f32 %v589, %v909
      %v912 = vmul.f32 %v590, %v908
      %v913 = vmul.f32 %v591, %v909
      %v914 = vmul.f32 %v592, %v908
      %v915 = vmul.f32 %v593, %v909
      %v916 = vmul.f32 %v594, %v908
      %v917 = vmul.f32 %v595, %v909
      %v918 = vmul.f32 %v596, %v908
      %v919 = vmul.f32 %v597, %v909
      %v920 = vmul.f32 %v598, %v908
      %v921 = vmul.f32 %v599, %v909
      %v922 = vmul.f32 %v600, %v908
      %v923 = vmul.f32 %v601, %v909
      %v924 = vmul.f32 %v602, %v908
      %v925 = vmul.f32 %v603, %v909
      %v926 = vmul.f32 %v604, %v908
      %v927 = vmul.f32 %v605, %v909
      %v928 = vmul.f32 %v606, %v908
      %v929 = vmul.f32 %v607, %v909
      %v930 = vmul.f32 %v608, %v908
      %v931 = vmul.f32 %v609, %v909
      %v932 = vmul.f32 %v610, %v908
      %v933 = vmul.f32 %v611, %v909
      %v934 = vmul.f32 %v612, %v908
      %v935 = vmul.f32 %v613, %v909
      %v936 = vmul.f32 %v614, %v908
      %v937 = vmul.f32 %v615, %v909
      %v938 = vmul.f32 %v616, %v908
      %v939 = vmul.f32 %v617, %v909
      %v940 = vmul.f32 %v618, %v908
      %v941 = vmul.f32 %v619, %v909
      %942 = vst [vmem:[%s264] sm:$0xff] %v910
      %943 = vst [vmem:[%s264 + $0x8] sm:$0xff] %v911
      %944 = vst [vmem:[%s264 + $0x10] sm:$0xff] %v912
      %945 = vst [vmem:[%s264 + $0x18] sm:$0xff] %v913
      %946 = vst [vmem:[%s264 + $0x20] sm:$0xff] %v914
      %947 = vst [vmem:[%s264 + $0x28] sm:$0xff] %v915
      %948 = vst [vmem:[%s264 + $0x30] sm:$0xff] %v916
      %949 = vst [vmem:[%s264 + $0x38] sm:$0xff] %v917
      %950 = vst [vmem:[%s264 + $0x40] sm:$0xff] %v918
      %951 = vst [vmem:[%s264 + $0x48] sm:$0xff] %v919
      %952 = vst [vmem:[%s264 + $0x50] sm:$0xff] %v920
      %953 = vst [vmem:[%s264 + $0x58] sm:$0xff] %v921
      %954 = vst [vmem:[%s264 + $0x60] sm:$0xff] %v922
      %955 = vst [vmem:[%s264 + $0x68] sm:$0xff] %v923
      %956 = vst [vmem:[%s264 + $0x70] sm:$0xff] %v924
      %957 = vst [vmem:[%s264 + $0x78] sm:$0xff] %v925
      %958 = vst [vmem:[%s264 + $0x80] sm:$0xff] %v926
      %959 = vst [vmem:[%s264 + $0x88] sm:$0xff] %v927
      %960 = vst [vmem:[%s264 + $0x90] sm:$0xff] %v928
      %961 = vst [vmem:[%s264 + $0x98] sm:$0xff] %v929
      %962 = vst [vmem:[%s264 + $0xa0] sm:$0xff] %v930
      %963 = vst [vmem:[%s264 + $0xa8] sm:$0xff] %v931
      %964 = vst [vmem:[%s264 + $0xb0] sm:$0xff] %v932
      %965 = vst [vmem:[%s264 + $0xb8] sm:$0xff] %v933
      %966 = vst [vmem:[%s264 + $0xc0] sm:$0xff] %v934
      %967 = vst [vmem:[%s264 + $0xc8] sm:$0xff] %v935
      %968 = vst [vmem:[%s264 + $0xd0] sm:$0xff] %v936
      %969 = vst [vmem:[%s264 + $0xd8] sm:$0xff] %v937
      %970 = vst [vmem:[%s264 + $0xe0] sm:$0xff] %v938
      %971 = vst [vmem:[%s264 + $0xe8] sm:$0xff] %v939
      %972 = vst [vmem:[%s264 + $0xf0] sm:$0xff] %v940
      %973 = vst [vmem:[%s264 + $0xf8] sm:$0xff] %v941
      %s974 = smul.u32 2, %s23
      %p975 = scmp.lt.s32.totalorder %s22, 1
      %s976 = scalar_select %p975, %s22, 1
      %p977 = scmp.lt.s32.totalorder %s974, 1
      %s978 = scalar_select %p977, %s974, 1
      %s979 = smul.addr %s976, 32
      %s980 = sadd.s32 %s978, %s979
      %s981 = smul.addr %s980, 8
      %s982 = scalar_lea.vmem %s5, %s981
      // Predicated region
      $region41: #{spatial_attention_2d.1} parent=39 // pred_check
        %p983 = pneg %p162
      $region42: #{spatial_attention_2d.1} parent=39 // pred_check_branch
        %985 = sbr.rel (%p983) target = $region44
      $region43: #{spatial_attention_2d.1} parent=39 // pred_region
        %s986 = smul.u32 2, %s23
      $region44: #{spatial_attention_2d.1} parent=39 // pred_fallthru
        _
    $region40: #{spatial_attention_2d.1} parent=5 // pred_fallthru
      _
    %p987 = scmp.le.s32.totalorder 2, %s13
    // Predicated region
    $region45: #{spatial_attention_2d.1} parent=5 // pred_check
      %p988 = pneg %p987
    $region46: #{spatial_attention_2d.1} parent=5 // pred_check_branch
      %990 = sbr.rel (%p988) target = $region48
    $region47: #{spatial_attention_2d.1} parent=5 // pred_region
      %s991 = ssub.s32 %s13, 2
      // Predicated region
      $region49: #{spatial_attention_2d.1} parent=47 // pred_check
        %p992 = pneg %p168
      $region50: #{spatial_attention_2d.1} parent=47 // pred_check_branch
        %994 = sbr.rel (%p992) target = $region52
      $region51: #{spatial_attention_2d.1} parent=47 // pred_region
        %s995 = smul.u32 2, %s25
        %p996 = scmp.lt.s32.totalorder %s24, 1
        %s997 = scalar_select %p996, %s24, 1
        %p998 = scmp.lt.s32.totalorder %s995, 1
        %s999 = scalar_select %p998, %s995, 1
        %s1000 = smul.addr %s997, 32
        %s1001 = sadd.s32 %s999, %s1000
        %s1002 = smul.addr %s1001, 8
        %s1003 = scalar_lea.vmem %s5, %s1002
      $region52: #{spatial_attention_2d.1} parent=47 // pred_fallthru
        _
    $region48: #{spatial_attention_2d.1} parent=5 // pred_fallthru
      _
  $region6: #{spatial_attention_2d.1} parent=0 // loop_footer
    %s17 = sadd.s32 1, %s13
  $region7: #{spatial_attention_2d.1} parent=0 // loop_footer_branch
    %12 = sbr.rel target = $region3
  $region8: #{spatial_attention_2d.1} parent=0 // loop_exit
    _

</llo_original>
